<compile_context>
chip_gen: v6e
topology: v6e:2x2x1
jax: 0.10.0
libtpu: 0.0.40
codegen_flags: <defaults>
</compile_context>

<pallas_src>
import math
import functools

import jax
import jax.numpy as jnp
from jax.experimental import pallas as pl
from jax.experimental.pallas import tpu as pltpu


def _pe_add_dropout_kernel(seed_ref, x_ref, pe_ref, o_ref, *,
                           p, training, total_batch):
    """Elementwise hot path: x + positional_encoding, then (optional) dropout."""
    x = x_ref[...]                      # (ts, tb, emb), input dtype
    pe = pe_ref[...]                    # (ts, 1, emb), same dtype
    y = x + pe                          # broadcast over the batch dim

    if training and p > 0.0:
        if p >= 1.0:
            # nn.Dropout(p=1.0) in train mode zeros everything.
            y = jnp.zeros_like(y)
        else:
            ts, tb, emb = y.shape
            # Global element index (unique across the whole tensor) -> hash.
            seq0 = pl.program_id(0) * ts
            b0 = pl.program_id(1) * tb
            r = jax.lax.broadcasted_iota(jnp.int32, y.shape, 0) + seq0
            b = jax.lax.broadcasted_iota(jnp.int32, y.shape, 1) + b0
            e = jax.lax.broadcasted_iota(jnp.int32, y.shape, 2)
            gidx = (r * total_batch + b) * emb + e

            seed_u = seed_ref[0].astype(jnp.uint32) * jnp.uint32(0x9E3779B1)
            h = gidx.astype(jnp.uint32) ^ seed_u
            # murmur3 finalizer (pure VPU int ops; works on TPU and interpret).
            h = h ^ (h >> 16)
            h = h * jnp.uint32(0x85EBCA6B)
            h = h ^ (h >> 13)
            h = h * jnp.uint32(0xC2B2AE35)
            h = h ^ (h >> 16)

            threshold = jnp.uint32(min(int(round(p * 4294967296.0)),
                                       4294967295))
            keep = h >= threshold
            inv_keep = 1.0 / (1.0 - p)   # weak-typed: stays in input dtype
            y = jnp.where(keep, y * inv_keep, jnp.zeros_like(y))
    # training=False == module.eval(): dropout is the identity.

    o_ref[...] = y.astype(o_ref.dtype)


def make_positional_encoding_table(embedding_size: int, maxlen: int = 5000,
                                   dtype=jnp.float32):
    """Mirrors PositionalEncoding.__init__: returns (maxlen, 1, embedding_size)."""
    if embedding_size % 2 == 0:
        # Faithful to the reference: pe[:, 1::2] = cos(pos * den[:-1]) only
        # shape-checks when embedding_size is odd.
        raise ValueError(
            "Reference PositionalEncoding only shape-checks for odd "
            "embedding_size (cos column uses den[:-1]).")
    den = jnp.exp(-jnp.arange(0, embedding_size, 2, dtype=jnp.float32)
                  * math.log(10000.0) / embedding_size)
    pos = jnp.arange(0, maxlen, dtype=jnp.float32).reshape(maxlen, 1)
    pe = jnp.zeros((maxlen, embedding_size), dtype=jnp.float32)
    pe = pe.at[:, 0::2].set(jnp.sin(pos * den))
    pe = pe.at[:, 1::2].set(jnp.cos(pos * den[:-1]))
    return pe[:, None, :].astype(dtype)        # (maxlen, 1, embedding_size)


def _vmem_budget():
    """(target_block_bytes, vmem_limit_bytes) per TPU generation."""
    try:
        info = pltpu.get_tpu_info()
        cap = int(getattr(info, "vmem_capacity_bytes", 64 << 20))
    except Exception:
        cap = 64 << 20                      # conservative (v7x-sized) fallback
    if cap >= (100 << 20):                  # v5e / v6e: 128 MiB physical VMEM
        return 8 << 20, 96 << 20
    else:                                   # v7x: 64 MiB physical VMEM
        return 4 << 20, 48 << 20


def _choose_tiles(seq_len, batch, emb, itemsize, target_block_bytes):
    """Pick (seq_tile, batch_tile) so an x block is ~<= target_block_bytes."""
    row_bytes = max(1, batch * emb * itemsize)
    if 8 * row_bytes <= target_block_bytes or batch <= 8:
        tb = batch
        ts = max(8, (target_block_bytes // row_bytes) // 8 * 8)
        ts = min(ts, seq_len)
        if ts > 8:
            ts -= ts % 8
        ts = max(1, ts)
    else:
        # batch*emb row too big for one block: tile batch too (multiple of 8).
        ts = min(8, seq_len)
        tb = max(8, (target_block_bytes // max(1, 8 * emb * itemsize)) // 8 * 8)
        tb = min(tb, batch)
        tb -= tb % 8
        tb = max(8, tb)
    return int(ts), int(tb)


def positional_encoding_forward(token_embedding, pe_table, *,
                                dropout_p: float = 0.1,
                                training: bool = False,
                                seed: int = 0):
    """Pallas forward pass: dropout(token_embedding + pe[:seq_len])."""
    seq_len, batch, emb = token_embedding.shape
    if pe_table.ndim == 2:                       # accept (maxlen, emb) too
        pe_table = pe_table[:, None, :]
    maxlen, _, emb_t = pe_table.shape
    assert emb_t == emb, "pe_table embedding size mismatch"
    assert seq_len <= maxlen, "sequence longer than positional table"

    # Keep the hot loop in the activation dtype (bf16-native on v6e/v7x).
    pe_table = pe_table.astype(token_embedding.dtype)

    target_block_bytes, vmem_limit = _vmem_budget()
    ts, tb = _choose_tiles(seq_len, batch, emb,
                           jnp.dtype(token_embedding.dtype).itemsize,
                           target_block_bytes)
    grid = (pl.cdiv(seq_len, ts), pl.cdiv(batch, tb))
    seed_arr = jnp.asarray([seed], dtype=jnp.int32)

    kernel = functools.partial(_pe_add_dropout_kernel,
                               p=float(dropout_p),
                               training=bool(training),
                               total_batch=int(batch))

    # TODO(synk): on v7x, switching the seq axis to pltpu.CORE_PARALLEL (or a
    # pl.core_map over the 2-TC mesh) would engage both TensorCores; kept as
    # plain "parallel" here for portability across generations / interpret mode.
    return pl.pallas_call(
        kernel,
        out_shape=jax.ShapeDtypeStruct(token_embedding.shape,
                                       token_embedding.dtype),
        grid=grid,
        in_specs=[
            pl.BlockSpec(memory_space=pltpu.MemorySpace.SMEM),           # seed
            pl.BlockSpec((ts, tb, emb), lambda i, j: (i, j, 0)),         # x
            pl.BlockSpec((ts, 1, emb), lambda i, j: (i, 0, 0)),          # pe
        ],
        out_specs=pl.BlockSpec((ts, tb, emb), lambda i, j: (i, j, 0)),
        compiler_params=pltpu.CompilerParams(
            dimension_semantics=("parallel", "parallel"),
            vmem_limit_bytes=int(vmem_limit)),
    )(seed_arr, token_embedding, pe_table)


if __name__ == "__main__":
    # Small shapes consistent with the module's forward pass.
    SEQ, BATCH, EMB = 8, 2, 33          # EMB must be odd (see NOTE above)
    MAXLEN = 64
    DROPOUT_P = 0.1

    key = jax.random.PRNGKey(0)
    x = jax.random.normal(key, (SEQ, BATCH, EMB), dtype=jnp.float32)

    pe_table = make_positional_encoding_table(EMB, maxlen=MAXLEN)  # (MAXLEN,1,EMB)
    ref = x + pe_table[:SEQ]                                       # broadcast over batch

    # 1) Eval mode (dropout == identity): deterministic, exact check.
    out_eval = positional_encoding_forward(x, pe_table,
                                           dropout_p=DROPOUT_P, training=False)
    out_eval = jax.block_until_ready(out_eval)
    assert out_eval.shape == x.shape and out_eval.dtype == x.dtype
    assert jnp.allclose(out_eval, ref, atol=1e-6, rtol=1e-6), "eval mismatch"

    # 2) Training mode: exercises the dropout path.  Every element must be
    #    either dropped (0) or kept and scaled by 1/(1-p).
    out_train = positional_encoding_forward(x, pe_table,
                                            dropout_p=DROPOUT_P, training=True,
                                            seed=1234)
    out_train = jax.block_until_ready(out_train)
    scaled = ref * (1.0 / (1.0 - DROPOUT_P))
    ok = (jnp.isclose(out_train, 0.0, atol=1e-6)
          | jnp.isclose(out_train, scaled, atol=1e-5, rtol=1e-5))
    assert bool(jnp.all(ok)), "training-mode dropout mismatch"

    print("KERNEL_OK")
</pallas_src>

<mosaic_0001>
module attributes {stable_mosaic.version = 11 : i64} {
  func.func @_pe_add_dropout_kernel(%arg0: i32, %arg1: i32, %arg2: memref<1xi32, #tpu.memory_space<smem>>, %arg3: memref<8x2x33xf32, #tpu.memory_space<vmem>>, %arg4: memref<8x1x33xf32, #tpu.memory_space<vmem>>, %arg5: memref<8x2x33xf32, #tpu.memory_space<vmem>>) attributes {dimension_semantics = [#tpu.dimension_semantics<parallel>, #tpu.dimension_semantics<parallel>], iteration_bounds = array<i64: 1, 1>, scalar_prefetch = 0 : i64, scratch_operands = 0 : i64, tpu.core_type = #tpu.core_type<tc>, window_params = [{transform_indices = @transform_0, window_bounds = array<i64: 1>}, {transform_indices = @transform_1, window_bounds = array<i64: 8, 2, 33>}, {transform_indices = @transform_2, window_bounds = array<i64: 8, 1, 33>}, {transform_indices = @transform_3, window_bounds = array<i64: 8, 2, 33>}]} {
    %c0 = arith.constant 0 : index
    %c0_0 = arith.constant 0 : index
    %c0_1 = arith.constant 0 : index
    %0 = vector.load %arg3[%c0, %c0_0, %c0_1] : memref<8x2x33xf32, #tpu.memory_space<vmem>>, vector<8x2x33xf32>
    %c0_2 = arith.constant 0 : index
    %c0_3 = arith.constant 0 : index
    %c0_4 = arith.constant 0 : index
    %1 = vector.load %arg4[%c0_2, %c0_3, %c0_4] : memref<8x1x33xf32, #tpu.memory_space<vmem>>, vector<8x1x33xf32>
    %2 = vector.broadcast %1 : vector<8x1x33xf32> to vector<8x2x33xf32>
    %3 = arith.addf %0, %2 : vector<8x2x33xf32>
    %c0_5 = arith.constant 0 : index
    %c0_6 = arith.constant 0 : index
    %c0_7 = arith.constant 0 : index
    %4 = vector.load %arg5[%c0_5, %c0_6, %c0_7] : memref<8x2x33xf32, #tpu.memory_space<vmem>>, vector<8x2x33xf32>
    tpu.vector_store %arg5[%c0_5, %c0_6, %c0_7], %3 {strides = array<i32>} : memref<8x2x33xf32, #tpu.memory_space<vmem>>, vector<8x2x33xf32>,
    return
  }
  func.func @transform_0(%arg0: i32, %arg1: i32) -> i32 {
    %c0_i32 = arith.constant 0 : i32
    %c0_i32_0 = arith.constant 0 : i32
    return %c0_i32 : i32
  }
  func.func @transform_1(%arg0: i32, %arg1: i32) -> (i32, i32, i32) {
    %c0_i32 = arith.constant 0 : i32
    %c0_i32_0 = arith.constant 0 : i32
    return %arg0, %arg1, %c0_i32 : i32, i32, i32
  }
  func.func @transform_2(%arg0: i32, %arg1: i32) -> (i32, i32, i32) {
    %c0_i32 = arith.constant 0 : i32
    %c0_i32_0 = arith.constant 0 : i32
    %c0_i32_1 = arith.constant 0 : i32
    return %arg0, %c0_i32, %c0_i32_0 : i32, i32, i32
  }
  func.func @transform_3(%arg0: i32, %arg1: i32) -> (i32, i32, i32) {
    %c0_i32 = arith.constant 0 : i32
    %c0_i32_0 = arith.constant 0 : i32
    return %arg0, %arg1, %c0_i32 : i32, i32, i32
  }
}

</mosaic_0001>

<llo_original>
// kernel: tpu_custom_call.1
$region0: #{tpu_custom_call.1}
  #allocation0 [shape = 'u32[]', space=smem, size = 0x4, offset = 0x4, fixed_abs, tag = 'smem constant byte address 0x4 - core index']
  #allocation1 [shape = 'u32[144,128]{1,0:T(1,128)}', space=vmem, size = 0x12000, scoped, tag = 'internal scratch']
  #allocation2 [shape = 's32[1]{0:T(128)S(6)}', space=smem, size = 0x200, scoped, tag = 'scoped memory for tpu_custom_call.1']
  %s0 = inlined_call_operand.<no memory space> [shape: s32[1], index: 0, kind: input, shape index: {}]
  %s1 = inlined_call_operand.vmem [shape: f32[8,2,33], index: 1, kind: input, shape index: {}]
  %s2 = inlined_call_operand.vmem [shape: f32[64,1,33], index: 2, kind: input, shape index: {}]
  %s3 = inlined_call_operand.hbm [shape: f32[8,2,33], index: 3, kind: output, shape index: {}]
  %s4 = sld [smem:[#allocation0]]
  $region22: #{tpu_custom_call.1} parent=0
    _
  %s6 = ssub.s32 1, %s4
  %s7 = scalar_select 0, %s6, %s4
  %8 = sst [smem:[#allocation2]] %s0
  $region1: #{tpu_custom_call.1} parent=0
    #allocation3 [shape = 'u8[8192]{0}', space=vmem, size = 0x2000, scoped, tag = 'output window, operand 0, single buffered']
    #allocation4 [shape = 's32[1]{0}', space=sflag, size = 0x4, scoped, tag = 'scoped memory for tpu_custom_call.1']
    %9 = vsyncpa [#allocation4], 0
    // Predicated region
    $region2: #{tpu_custom_call.1} parent=1 // pred_check
      _
    $region3: #{tpu_custom_call.1} parent=1 // pred_check_branch
      %11 = sbr.rel (0) target = $region5
    $region4: #{tpu_custom_call.1} parent=1 // pred_region
      _
    $region5: #{tpu_custom_call.1} parent=1 // pred_fallthru
      _
    // Predicated region
    $region6: #{tpu_custom_call.1} parent=1 // pred_check
      _
    $region7: #{tpu_custom_call.1} parent=1 // pred_check_branch
      %13 = sbr.rel (0) target = $region9
    $region8: #{tpu_custom_call.1} parent=1 // pred_region
      _
    $region9: #{tpu_custom_call.1} parent=1 // pred_fallthru
      _
    // Predicated region
    $region10: #{tpu_custom_call.1} parent=1 // pred_check
      _
    $region11: #{tpu_custom_call.1} parent=1 // pred_check_branch
      %15 = sbr.rel (0) target = $region13
    $region12: #{tpu_custom_call.1} parent=1 // pred_region
      _
    $region13: #{tpu_custom_call.1} parent=1 // pred_fallthru
      _
    %v16 = vld [vmem:[%s1] sm:$0x3]
    %v17 = vld [vmem:[%s1 + $0x2] sm:$0x3]
    %v18 = vld [vmem:[%s1 + $0x4] sm:$0x3]
    %v19 = vld [vmem:[%s1 + $0x6] sm:$0x3]
    %v20 = vld [vmem:[%s1 + $0x8] sm:$0x3]
    %v21 = vld [vmem:[%s1 + $0xa] sm:$0x3]
    %v22 = vld [vmem:[%s1 + $0xc] sm:$0x3]
    %v23 = vld [vmem:[%s1 + $0xe] sm:$0x3]
    %v24 = vld [vmem:[%s2] sm:$0x1]
    %v25 = vld [vmem:[%s2 + $0x1] sm:$0x1]
    %v26 = vld [vmem:[%s2 + $0x2] sm:$0x1]
    %v27 = vld [vmem:[%s2 + $0x3] sm:$0x1]
    %v28 = vld [vmem:[%s2 + $0x4] sm:$0x1]
    %v29 = vld [vmem:[%s2 + $0x5] sm:$0x1]
    %v30 = vld [vmem:[%s2 + $0x6] sm:$0x1]
    %v31 = vld [vmem:[%s2 + $0x7] sm:$0x1]
    %v40 = vlaneseq
    %v41 = vshrl.u32 %v40, 7
    %v42 = vsub.s32 0, %v41
    %v43 = vrot.slane %v24, %v42
    %v44 = vlaneseq
    %v45 = vshrl.u32 %v44, 7
    %v46 = vsub.s32 0, %v45
    %v47 = vrot.slane %v25, %v46
    %v48 = vlaneseq
    %v49 = vshrl.u32 %v48, 7
    %v50 = vsub.s32 0, %v49
    %v51 = vrot.slane %v26, %v50
    %v52 = vlaneseq
    %v53 = vshrl.u32 %v52, 7
    %v54 = vsub.s32 0, %v53
    %v55 = vrot.slane %v27, %v54
    %v56 = vlaneseq
    %v57 = vshrl.u32 %v56, 7
    %v58 = vsub.s32 0, %v57
    %v59 = vrot.slane %v28, %v58
    %v60 = vlaneseq
    %v61 = vshrl.u32 %v60, 7
    %v62 = vsub.s32 0, %v61
    %v63 = vrot.slane %v29, %v62
    %v64 = vlaneseq
    %v65 = vshrl.u32 %v64, 7
    %v66 = vsub.s32 0, %v65
    %v67 = vrot.slane %v30, %v66
    %v68 = vlaneseq
    %v69 = vshrl.u32 %v68, 7
    %v70 = vsub.s32 0, %v69
    %v71 = vrot.slane %v31, %v70
    %v80 = vadd.f32 %v16, %v43
    %v81 = vadd.f32 %v17, %v47
    %v82 = vadd.f32 %v18, %v51
    %v83 = vadd.f32 %v19, %v55
    %v84 = vadd.f32 %v20, %v59
    %v85 = vadd.f32 %v21, %v63
    %v86 = vadd.f32 %v22, %v67
    %v87 = vadd.f32 %v23, %v71
    %vm88 = vcmask 263168
    %89 = vst.msk [vmem:[#allocation3] sm:$0x3] %vm88, %v80
    %90 = vst.msk [vmem:[#allocation3 + $0x2] sm:$0x3] %vm88, %v81
    %91 = vst.msk [vmem:[#allocation3 + $0x4] sm:$0x3] %vm88, %v82
    %92 = vst.msk [vmem:[#allocation3 + $0x6] sm:$0x3] %vm88, %v83
    %93 = vst.msk [vmem:[#allocation3 + $0x8] sm:$0x3] %vm88, %v84
    %94 = vst.msk [vmem:[#allocation3 + $0xa] sm:$0x3] %vm88, %v85
    %95 = vst.msk [vmem:[#allocation3 + $0xc] sm:$0x3] %vm88, %v86
    %96 = vst.msk [vmem:[#allocation3 + $0xe] sm:$0x3] %vm88, %v87
    // Predicated region
    $region14: #{tpu_custom_call.1} parent=1 // pred_check
      _
    $region15: #{tpu_custom_call.1} parent=1 // pred_check_branch
      %98 = sbr.rel (0) target = $region17
    $region16: #{tpu_custom_call.1} parent=1 // pred_region
      %s100 = ssub.s32 256, 256
      %101 = vsyncadd [#allocation4], %s100
      %s102 = sshll.u32 [#allocation3], 4
      %s103 = int_to_ptr.vmem [resolvable:$true] %s102
      %108 = dma.vmem_to_hbm [thread:$0]  %s103, 256, %s3, [#allocation4], 32, 32, 2
    $region17: #{tpu_custom_call.1} parent=1 // pred_fallthru
      _
    // Predicated region
    $region18: #{tpu_custom_call.1} parent=1 // pred_check
      _
    $region19: #{tpu_custom_call.1} parent=1 // pred_check_branch
      %110 = sbr.rel (0) target = $region21
    $region20: #{tpu_custom_call.1} parent=1 // pred_region
      %111 = dma.done [#allocation4], 256
    $region21: #{tpu_custom_call.1} parent=1 // pred_fallthru
      _
    %112 = vsyncpa [#allocation4], 1

</llo_original>
